<compile_context>
chip_gen: v6e
topology: v6e:2x2x1
jax: 0.10.0
libtpu: 0.0.40
codegen_flags: <defaults>
</compile_context>

<pallas_src>
import math

import jax
import jax.numpy as jnp
import numpy as np
from jax.experimental import pallas as pl
from jax.experimental.pallas import tpu as pltpu


def _round_up(x, m):
    return ((x + m - 1) // m) * m


def _tarot_block_kernel(tn_ref, t_ref, ctx_ref, center_ref, best_ref, idx_ref):
    tn = tn_ref[...]                                      # (Cb, N, D) normalized rows
    t = t_ref[...]                                        # (Cb, N, D) raw rows
    diff = ctx_ref[...] - center_ref[...]                 # (Cb, 1, D)

    # Similarities: pre-normalized rows . (context - center).  The direction
    # normalization is a single positive per-card scale -> argmax-invariant.
    sims = jnp.sum(tn * diff, axis=-1, keepdims=True)     # (Cb, N, 1)  VPU + XLU

    n = tn.shape[1]
    ids = jax.lax.broadcasted_iota(jnp.int32, sims.shape, 1)   # (Cb, N, 1)
    maxv = jnp.max(sims, axis=1, keepdims=True)                # (Cb, 1, 1)

    # First-occurrence argmax (torch.argmax semantics), clamped so a
    # pathological all-NaN row cannot select past the last tractovka.
    idx = jnp.min(jnp.where(sims == maxv, ids, n), axis=1, keepdims=True)
    idx = jnp.minimum(idx, n - 1)                              # (Cb, 1, 1)

    # One-hot masked select of the best raw tractovka row: vector-only path
    # (VPU select + XLU sublane reduce), no scalar-dependent VMEM gather.
    onehot = (ids == idx).astype(t.dtype)                      # (Cb, N, 1)
    best_ref[...] = jnp.sum(onehot * t, axis=1)                # (Cb, D)
    idx_ref[...] = idx[:, 0, :].astype(jnp.int32)              # (Cb, 1)


def _choose_cards_per_block(C, N, D):
    """Size-gated card-block choice.

    At toy sizes one grid step is fastest (per-block work is far below the
    ~0.35 us step overhead).  Once C/N/D grow, split into >= 2 sublane-aligned
    blocks so (a) v7x can shard the "parallel" axis across its two TensorCores
    and (b) the BlockSpec pipeline can hide the tractovki HBM->VMEM DMA.
    """
    work_per_half = (C // 2) * N * D
    if C >= 16 and work_per_half >= 64 * 1024:
        cb = _round_up(pl.cdiv(C, 2), 8)
        # VMEM budget (v7x: 64 MiB physical, 32 MiB default scoped): two
        # (Cb, N, D) f32 input streams, double buffered -> 16*Cb*N*D bytes.
        while cb > 8 and 16 * cb * N * D > 24 * 1024 * 1024:
            cb = _round_up(cb // 2, 8)
        return cb
    return C


def prepare_tarot_params(tractovki, centers, cards_per_block=None):
    """One-time (init) parameter prep: normalization + card-axis padding.

    tractovki: (C, N, D), centers: (C, 1, D).  Returns a dict consumed by
    tarot_network_forward; nothing in here is recomputed per call.
    """
    C, N, D = tractovki.shape
    tractovki = tractovki.astype(jnp.float32)
    centers = centers.astype(jnp.float32)

    # Row-normalized copy, exactly F.normalize(..., eps=1e-12).
    tn = tractovki / jnp.maximum(
        jnp.sqrt(jnp.sum(jnp.square(tractovki), axis=-1, keepdims=True)), 1e-12)

    if cards_per_block is None:
        cards_per_block = _choose_cards_per_block(C, N, D)
    Cb = int(cards_per_block)
    if Cb != C:
        # Splitting the card axis: the 2-D output blocks (Cb, D)/(Cb, 1) need
        # a sublane-aligned Cb (multiple of 8) unless Cb equals the full dim.
        Cb = _round_up(Cb, 8)
    G = pl.cdiv(C, Cb)
    Cp = G * Cb

    if Cp != C:
        pad = ((0, Cp - C), (0, 0), (0, 0))
        tractovki = jnp.pad(tractovki, pad)
        tn = jnp.pad(tn, pad)
        centers = jnp.pad(centers, pad)

    return dict(tract=tractovki, tract_norm=tn, centers=centers,
                C=C, Cp=Cp, Cb=Cb, G=G, N=N, D=D)


def tarot_network_forward(params, contexts, points_per_context):
    """contexts: (C, 1, D) -> (best (C, D), idx (C,), context_idx (C,))."""
    C, Cp, Cb, G, N, D = (params[k] for k in ("C", "Cp", "Cb", "G", "N", "D"))

    contexts = contexts.astype(jnp.float32)
    if Cp != C:  # only the tiny per-call input slab ever needs padding
        contexts = jnp.pad(contexts, ((0, Cp - C), (0, 0), (0, 0)))

    best, idx = pl.pallas_call(
        _tarot_block_kernel,
        out_shape=(
            jax.ShapeDtypeStruct((Cp, D), jnp.float32),
            jax.ShapeDtypeStruct((Cp, 1), jnp.int32),
        ),
        grid_spec=pltpu.PrefetchScalarGridSpec(
            num_scalar_prefetch=0,
            grid=(G,),
            in_specs=[
                pl.BlockSpec((Cb, N, D), lambda g: (g, 0, 0)),  # normalized rows
                pl.BlockSpec((Cb, N, D), lambda g: (g, 0, 0)),  # raw rows
                pl.BlockSpec((Cb, 1, D), lambda g: (g, 0, 0)),  # contexts
                pl.BlockSpec((Cb, 1, D), lambda g: (g, 0, 0)),  # centers
            ],
            out_specs=[
                pl.BlockSpec((Cb, D), lambda g: (g, 0)),        # best tractovka
                pl.BlockSpec((Cb, 1), lambda g: (g, 0)),        # best index
            ],
        ),
        # Cards are independent -> parallel axis; with G >= 2 v7x shards card
        # blocks across both TensorCores (neutral on v5e/v6e, no-op at G=1).
        compiler_params=pltpu.CompilerParams(
            dimension_semantics=("parallel",)),
    )(params["tract_norm"], params["tract"], contexts, params["centers"])

    best = best[:C]                              # (C, D)
    idx = idx[:C, 0]                             # (C,)
    context_idx = idx // points_per_context      # get_context_index (glue)
    return best, idx, context_idx


def init_tractovki(key, num_contexts, points_per_context, embedding_dim,
                   radius=5.0):
    """Deterministic re-implementation of _init_contextual_tractovki."""
    N = num_contexts * points_per_context
    c = jnp.arange(num_contexts, dtype=jnp.float32)
    phi = math.pi * (c + 0.5) / num_contexts                    # (num_contexts,)
    p = jnp.arange(points_per_context, dtype=jnp.float32)
    theta = 2.0 * math.pi * p / points_per_context              # (P,)
    x = radius * jnp.sin(phi)[:, None] * jnp.cos(theta)[None, :]
    y = radius * jnp.sin(phi)[:, None] * jnp.sin(theta)[None, :]
    z = radius * jnp.cos(phi)[:, None] * jnp.ones_like(theta)[None, :]
    xyz = jnp.stack([x, y, z], axis=-1).reshape(N, 3)
    if embedding_dim > 3:
        tail = jax.random.normal(key, (N, embedding_dim - 3)) * 0.1
        t = jnp.concatenate([xyz, tail], axis=-1)
    else:
        t = xyz[:, :embedding_dim]
    return t.astype(jnp.float32)


if __name__ == "__main__":
    # Small, forward-consistent shapes
    card_names = ["fool", "magician"]
    embedding_dim = 32
    num_contexts = 4
    points_per_context = 8
    C = len(card_names)
    N = num_contexts * points_per_context

    key = jax.random.PRNGKey(0)
    keys = jax.random.split(key, 2 * C)

    # deterministic parameter init (per card)
    tractovki = jnp.stack([
        init_tractovki(keys[i], num_contexts, points_per_context, embedding_dim)
        for i in range(C)])                                     # (C, N, D)
    centers = jnp.zeros((C, 1, embedding_dim), jnp.float32)     # (C, 1, D)

    # One-time parameter prep (normalized copy + padding), hoisted out of the
    # per-call path.
    params = prepare_tarot_params(tractovki, centers)

    # example inputs: one context vector per card (the dict values)
    contexts = jnp.stack([
        jax.random.normal(keys[C + i], (1, embedding_dim), dtype=jnp.float32)
        for i in range(C)])                                     # (C, 1, D)

    # jitted per-call path closes over the prepared parameters; the only
    # per-call work besides the kernel is the (optional) context pad.
    forward = jax.jit(
        lambda ctx: tarot_network_forward(params, ctx, points_per_context))

    best, idx, ctx_idx = forward(contexts)
    jax.block_until_ready((best, idx, ctx_idx))

    # pure-JAX reference check (full PyTorch-style normalization)
    diff = contexts.reshape(C, embedding_dim) - centers.reshape(C, embedding_dim)
    direction = diff / jnp.maximum(
        jnp.linalg.norm(diff, axis=-1, keepdims=True), 1e-12)
    tn_ref = tractovki / jnp.maximum(
        jnp.linalg.norm(tractovki, axis=-1, keepdims=True), 1e-12)
    sims = jnp.einsum("cnd,cd->cn", tn_ref, direction)
    ref_idx = jnp.argmax(sims, axis=-1).astype(jnp.int32)
    ref_best = jnp.take_along_axis(
        tractovki, ref_idx[:, None, None], axis=1).reshape(C, embedding_dim)

    assert bool(jnp.all(ref_idx == idx))
    assert bool(jnp.all(ctx_idx == ref_idx // points_per_context))
    np.testing.assert_allclose(np.asarray(best), np.asarray(ref_best),
                               rtol=1e-5, atol=1e-6)

    # dict-shaped output, mirroring the nn.Module forward
    outputs = {name: (best[i], int(idx[i]), int(ctx_idx[i]))
               for i, name in enumerate(card_names)}

    print("KERNEL_OK")
</pallas_src>

<mosaic_0001>
module attributes {stable_mosaic.version = 11 : i64} {
  func.func @_tarot_block_kernel(%arg0: i32, %arg1: memref<2x32x32xf32, #tpu.memory_space<vmem>>, %arg2: memref<2x32x32xf32, #tpu.memory_space<vmem>>, %arg3: memref<2x1x32xf32, #tpu.memory_space<vmem>>, %arg4: memref<2x1x32xf32, #tpu.memory_space<vmem>>, %arg5: memref<2x32xf32, #tpu.memory_space<vmem>>, %arg6: memref<2x1xi32, #tpu.memory_space<vmem>>) attributes {dimension_semantics = [#tpu.dimension_semantics<parallel>], iteration_bounds = array<i64: 1>, scalar_prefetch = 0 : i64, scratch_operands = 0 : i64, tpu.core_type = #tpu.core_type<tc>, window_params = [{transform_indices = @transform_0, window_bounds = array<i64: 2, 32, 32>}, {transform_indices = @transform_1, window_bounds = array<i64: 2, 32, 32>}, {transform_indices = @transform_2, window_bounds = array<i64: 2, 1, 32>}, {transform_indices = @transform_3, window_bounds = array<i64: 2, 1, 32>}, {transform_indices = @transform_4, window_bounds = array<i64: 2, 32>}, {transform_indices = @transform_5, window_bounds = array<i64: 2, 1>}]} {
    %c0 = arith.constant 0 : index
    %c0_0 = arith.constant 0 : index
    %c0_1 = arith.constant 0 : index
    %0 = vector.load %arg1[%c0, %c0_0, %c0_1] : memref<2x32x32xf32, #tpu.memory_space<vmem>>, vector<2x32x32xf32>
    %c0_2 = arith.constant 0 : index
    %c0_3 = arith.constant 0 : index
    %c0_4 = arith.constant 0 : index
    %1 = vector.load %arg2[%c0_2, %c0_3, %c0_4] : memref<2x32x32xf32, #tpu.memory_space<vmem>>, vector<2x32x32xf32>
    %c0_5 = arith.constant 0 : index
    %c0_6 = arith.constant 0 : index
    %c0_7 = arith.constant 0 : index
    %2 = vector.load %arg3[%c0_5, %c0_6, %c0_7] : memref<2x1x32xf32, #tpu.memory_space<vmem>>, vector<2x1x32xf32>
    %c0_8 = arith.constant 0 : index
    %c0_9 = arith.constant 0 : index
    %c0_10 = arith.constant 0 : index
    %3 = vector.load %arg4[%c0_8, %c0_9, %c0_10] : memref<2x1x32xf32, #tpu.memory_space<vmem>>, vector<2x1x32xf32>
    %4 = arith.subf %2, %3 : vector<2x1x32xf32>
    %5 = vector.broadcast %4 : vector<2x1x32xf32> to vector<2x32x32xf32>
    %6 = arith.mulf %0, %5 : vector<2x32x32xf32>
    %cst = arith.constant dense<0.000000e+00> : vector<2x32xf32>
    %7 = vector.multi_reduction <add>, %6, %cst [2] : vector<2x32x32xf32> to vector<2x32xf32>
    %8 = vector.shape_cast %7 : vector<2x32xf32> to vector<2x32x1xf32>
    %9 = tpu.iota {dimensions = array<i32: 1>} : vector<2x32x1xi32>
    %cst_11 = arith.constant dense<0xFF800000> : vector<2x1xf32>
    %10 = vector.multi_reduction <maximumf>, %8, %cst_11 [1] : vector<2x32x1xf32> to vector<2x1xf32>
    %11 = vector.shape_cast %10 : vector<2x1xf32> to vector<2x1x1xf32>
    %12 = vector.broadcast %11 : vector<2x1x1xf32> to vector<2x32x1xf32>
    %13 = arith.cmpf oeq, %8, %12 : vector<2x32x1xf32>
    %c32_i32 = arith.constant 32 : i32
    %14 = vector.broadcast %c32_i32 : i32 to vector<2x32x1xi32>
    %15 = arith.select %13, %9, %14 : vector<2x32x1xi1>, vector<2x32x1xi32>
    %cst_12 = arith.constant dense<2147483647> : vector<2x1xi32>
    %16 = vector.multi_reduction <minsi>, %15, %cst_12 [1] : vector<2x32x1xi32> to vector<2x1xi32>
    %17 = vector.shape_cast %16 : vector<2x1xi32> to vector<2x1x1xi32>
    %c31_i32 = arith.constant 31 : i32
    %18 = vector.broadcast %c31_i32 : i32 to vector<2x1x1xi32>
    %19 = arith.minsi %17, %18 : vector<2x1x1xi32>
    %20 = vector.broadcast %19 : vector<2x1x1xi32> to vector<2x32x1xi32>
    %21 = arith.cmpi eq, %9, %20 : vector<2x32x1xi32>
    %22 = arith.extui %21 : vector<2x32x1xi1> to vector<2x32x1xi32>
    %23 = arith.sitofp %22 : vector<2x32x1xi32> to vector<2x32x1xf32>
    %24 = vector.broadcast %23 : vector<2x32x1xf32> to vector<2x32x32xf32>
    %25 = arith.mulf %24, %1 : vector<2x32x32xf32>
    %cst_13 = arith.constant dense<0.000000e+00> : vector<2x32xf32>
    %26 = vector.multi_reduction <add>, %25, %cst_13 [1] : vector<2x32x32xf32> to vector<2x32xf32>
    %c0_14 = arith.constant 0 : index
    %c0_15 = arith.constant 0 : index
    %27 = vector.load %arg5[%c0_14, %c0_15] : memref<2x32xf32, #tpu.memory_space<vmem>>, vector<2x32xf32>
    tpu.vector_store %arg5[%c0_14, %c0_15], %26 {strides = array<i32>} : memref<2x32xf32, #tpu.memory_space<vmem>>, vector<2x32xf32>,
    %28 = vector.shape_cast %19 : vector<2x1x1xi32> to vector<2x1xi32>
    %c0_16 = arith.constant 0 : index
    %c0_17 = arith.constant 0 : index
    %29 = vector.load %arg6[%c0_16, %c0_17] : memref<2x1xi32, #tpu.memory_space<vmem>>, vector<2x1xi32>
    tpu.vector_store %arg6[%c0_16, %c0_17], %28 {strides = array<i32>} : memref<2x1xi32, #tpu.memory_space<vmem>>, vector<2x1xi32>,
    return
  }
  func.func @transform_0(%arg0: i32) -> (i32, i32, i32) {
    %c0_i32 = arith.constant 0 : i32
    %c0_i32_0 = arith.constant 0 : i32
    %c0_i32_1 = arith.constant 0 : i32
    return %arg0, %c0_i32, %c0_i32_0 : i32, i32, i32
  }
  func.func @transform_1(%arg0: i32) -> (i32, i32, i32) {
    %c0_i32 = arith.constant 0 : i32
    %c0_i32_0 = arith.constant 0 : i32
    %c0_i32_1 = arith.constant 0 : i32
    return %arg0, %c0_i32, %c0_i32_0 : i32, i32, i32
  }
  func.func @transform_2(%arg0: i32) -> (i32, i32, i32) {
    %c0_i32 = arith.constant 0 : i32
    %c0_i32_0 = arith.constant 0 : i32
    %c0_i32_1 = arith.constant 0 : i32
    return %arg0, %c0_i32, %c0_i32_0 : i32, i32, i32
  }
  func.func @transform_3(%arg0: i32) -> (i32, i32, i32) {
    %c0_i32 = arith.constant 0 : i32
    %c0_i32_0 = arith.constant 0 : i32
    %c0_i32_1 = arith.constant 0 : i32
    return %arg0, %c0_i32, %c0_i32_0 : i32, i32, i32
  }
  func.func @transform_4(%arg0: i32) -> (i32, i32) {
    %c0_i32 = arith.constant 0 : i32
    %c0_i32_0 = arith.constant 0 : i32
    return %arg0, %c0_i32 : i32, i32
  }
  func.func @transform_5(%arg0: i32) -> (i32, i32) {
    %c0_i32 = arith.constant 0 : i32
    %c0_i32_0 = arith.constant 0 : i32
    return %arg0, %c0_i32 : i32, i32
  }
}

</mosaic_0001>

<llo_original>
// kernel: _lambda_.1
$region0: #{_lambda_.1}
  #allocation0 [shape = 'u32[]', space=smem, size = 0x4, offset = 0x4, fixed_abs, tag = 'smem constant byte address 0x4 - core index']
  #allocation1 [shape = 'u32[144,128]{1,0:T(1,128)}', space=vmem, size = 0x12000, scoped, tag = 'internal scratch']
  %s0 = inlined_call_operand.hbm [shape: f32[2,32,32], index: 0, kind: input, shape index: {}]
  %s1 = inlined_call_operand.hbm [shape: f32[2,32,32], index: 1, kind: input, shape index: {}]
  %s2 = inlined_call_operand.vmem [shape: f32[2,1,32], index: 2, kind: input, shape index: {}]
  %s3 = inlined_call_operand.vmem [shape: f32[2,1,32], index: 3, kind: input, shape index: {}]
  %s4 = inlined_call_operand.hbm [shape: f32[2,32], index: 4, kind: output, shape index: {0}]
  %s5 = inlined_call_operand.vmem [shape: s32[2,1], index: 5, kind: output, shape index: {1}]
  %6 = xla_tuple %s4, %s5
  %s7 = sld [smem:[#allocation0]]
  $region42: #{_lambda_.1} parent=0
    _
  %s9 = ssub.s32 1, %s7
  %s10 = scalar_select 0, %s9, %s7
  $region1: #{_lambda_.1} parent=0
    #allocation2 [shape = 'u8[32768]{0}', space=vmem, size = 0x8000, scoped, tag = 'input window, operand 0, single buffered']
    #allocation3 [shape = 's32[1]{0}', space=sflag, size = 0x4, scoped, tag = 'scoped memory for _lambda_.1']
    #allocation4 [shape = 's32[1]{0}', space=sflag, size = 0x4, scoped, tag = 'scoped memory for _lambda_.1']
    #allocation5 [shape = 'u8[32768]{0}', space=vmem, size = 0x8000, scoped, tag = 'input window, operand 1, single buffered']
    #allocation6 [shape = 's32[1]{0}', space=sflag, size = 0x4, scoped, tag = 'scoped memory for _lambda_.1']
    #allocation7 [shape = 'u8[1024]{0}', space=vmem, size = 0x400, scoped, tag = 'output window, operand 0, single buffered']
    %11 = vsyncpa [#allocation3], 0
    %12 = vsyncpa [#allocation6], 0
    %13 = vsyncpa [#allocation4], 0
    // Predicated region
    $region2: #{_lambda_.1} parent=1 // pred_check
      _
    $region3: #{_lambda_.1} parent=1 // pred_check_branch
      %15 = sbr.rel (0) target = $region5
    $region4: #{_lambda_.1} parent=1 // pred_region
      %s17 = ssub.s32 1024, 1024
      %18 = vsyncadd [#allocation3], %s17
      %s19 = sshll.u32 [#allocation2], 4
      %s20 = int_to_ptr.vmem [resolvable:$true] %s19
      %25 = dma.hbm_to_vmem [thread:$0]  %s0, 1024, %s20, [#allocation3], 128, 128, 8
    $region5: #{_lambda_.1} parent=1 // pred_fallthru
      _
    // Predicated region
    $region6: #{_lambda_.1} parent=1 // pred_check
      _
    $region7: #{_lambda_.1} parent=1 // pred_check_branch
      %27 = sbr.rel (0) target = $region9
    $region8: #{_lambda_.1} parent=1 // pred_region
      %s29 = ssub.s32 1024, 1024
      %30 = vsyncadd [#allocation6], %s29
      %s31 = sshll.u32 [#allocation5], 4
      %s32 = int_to_ptr.vmem [resolvable:$true] %s31
      %37 = dma.hbm_to_vmem [thread:$0]  %s1, 1024, %s32, [#allocation6], 128, 128, 8
    $region9: #{_lambda_.1} parent=1 // pred_fallthru
      _
    // Predicated region
    $region10: #{_lambda_.1} parent=1 // pred_check
      _
    $region11: #{_lambda_.1} parent=1 // pred_check_branch
      %39 = sbr.rel (0) target = $region13
    $region12: #{_lambda_.1} parent=1 // pred_region
      _
    $region13: #{_lambda_.1} parent=1 // pred_fallthru
      _
    // Predicated region
    $region14: #{_lambda_.1} parent=1 // pred_check
      _
    $region15: #{_lambda_.1} parent=1 // pred_check_branch
      %41 = sbr.rel (0) target = $region17
    $region16: #{_lambda_.1} parent=1 // pred_region
      _
    $region17: #{_lambda_.1} parent=1 // pred_fallthru
      _
    // Predicated region
    $region18: #{_lambda_.1} parent=1 // pred_check
      _
    $region19: #{_lambda_.1} parent=1 // pred_check_branch
      %43 = sbr.rel (0) target = $region21
    $region20: #{_lambda_.1} parent=1 // pred_region
      %44 = dma.done [#allocation3], 1024
    $region21: #{_lambda_.1} parent=1 // pred_fallthru
      _
    // Predicated region
    $region22: #{_lambda_.1} parent=1 // pred_check
      _
    $region23: #{_lambda_.1} parent=1 // pred_check_branch
      %46 = sbr.rel (0) target = $region25
    $region24: #{_lambda_.1} parent=1 // pred_region
      %47 = dma.done [#allocation6], 1024
    $region25: #{_lambda_.1} parent=1 // pred_fallthru
      _
    %v48 = vld [vmem:[#allocation2] sm:$0xff]
    %v49 = vld [vmem:[#allocation2 + $0x8] sm:$0xff]
    %v50 = vld [vmem:[#allocation2 + $0x10] sm:$0xff]
    %v51 = vld [vmem:[#allocation2 + $0x18] sm:$0xff]
    %v52 = vld [vmem:[#allocation2 + $0x20] sm:$0xff]
    %v53 = vld [vmem:[#allocation2 + $0x28] sm:$0xff]
    %v54 = vld [vmem:[#allocation2 + $0x30] sm:$0xff]
    %v55 = vld [vmem:[#allocation2 + $0x38] sm:$0xff]
    %v56 = vld [vmem:[#allocation5] sm:$0xff]
    %v57 = vld [vmem:[#allocation5 + $0x8] sm:$0xff]
    %v58 = vld [vmem:[#allocation5 + $0x10] sm:$0xff]
    %v59 = vld [vmem:[#allocation5 + $0x18] sm:$0xff]
    %v60 = vld [vmem:[#allocation5 + $0x20] sm:$0xff]
    %v61 = vld [vmem:[#allocation5 + $0x28] sm:$0xff]
    %v62 = vld [vmem:[#allocation5 + $0x30] sm:$0xff]
    %v63 = vld [vmem:[#allocation5 + $0x38] sm:$0xff]
    %v64 = vld [vmem:[%s2] sm:$0x1]
    %v65 = vld [vmem:[%s2 + $0x1] sm:$0x1]
    %v66 = vld [vmem:[%s3] sm:$0x1]
    %v67 = vld [vmem:[%s3 + $0x1] sm:$0x1]
    %v68 = vsub.f32 %v64, %v66
    %v69 = vsub.f32 %v65, %v67
    %v72 = vlaneseq
    %v73 = vshrl.u32 %v72, 7
    %v74 = vsub.s32 0, %v73
    %v75 = vrot.slane %v68, %v74
    %v76 = vlaneseq
    %v77 = vshrl.u32 %v76, 7
    %v78 = vsub.s32 0, %v77
    %v79 = vrot.slane %v69, %v78
    %v82 = vmul.f32 %v48, %v75
    %v83 = vmul.f32 %v49, %v75
    %v84 = vmul.f32 %v50, %v75
    %v85 = vmul.f32 %v51, %v75
    %v86 = vmul.f32 %v52, %v79
    %v87 = vmul.f32 %v53, %v79
    %v88 = vmul.f32 %v54, %v79
    %v89 = vmul.f32 %v55, %v79
    %vm90 = vcmask 261120
    %v91 = vsel %vm90, %v82, 0.0
    %92 = vadd.xlane.f32.xlu0 %v91
    %v93 = vpop.xlane.xlu0 %92
    %v94 = vsel %vm90, %v83, 0.0
    %95 = vadd.xlane.f32.xlu0 %v94
    %v96 = vpop.xlane.xlu0 %95
    %v97 = vsel %vm90, %v84, 0.0
    %98 = vadd.xlane.f32.xlu0 %v97
    %v99 = vpop.xlane.xlu0 %98
    %v100 = vsel %vm90, %v85, 0.0
    %101 = vadd.xlane.f32.xlu0 %v100
    %v102 = vpop.xlane.xlu0 %101
    %v103 = vsel %vm90, %v86, 0.0
    %104 = vadd.xlane.f32.xlu0 %v103
    %v105 = vpop.xlane.xlu0 %104
    %v106 = vsel %vm90, %v87, 0.0
    %107 = vadd.xlane.f32.xlu0 %v106
    %v108 = vpop.xlane.xlu0 %107
    %v109 = vsel %vm90, %v88, 0.0
    %110 = vadd.xlane.f32.xlu0 %v109
    %v111 = vpop.xlane.xlu0 %110
    %v112 = vsel %vm90, %v89, 0.0
    %113 = vadd.xlane.f32.xlu0 %v112
    %v114 = vpop.xlane.xlu0 %113
    %v115 = vlaneseq
    %v116 = vshrl.u32 %v115, 7
    %v117 = vadd.s32 %v116, 8
    %v118 = vadd.s32 %v116, 16
    %v119 = vadd.s32 %v116, 24
    %v120 = vmax.f32 %v93, %v99
    %v121 = vmax.f32 %v96, %v102
    %v122 = vmax.f32 %v120, %v121
    %v123 = vrot.slane %v122, 4
    %v124 = vmax.f32 %v122, %v123
    %v125 = vrot.slane %v124, 2
    %v126 = vmax.f32 %v124, %v125
    %v127 = vrot.slane %v126, 1
    %v128 = vmax.f32 %v126, %v127
    %v129 = vmax.f32 %v105, %v111
    %v130 = vmax.f32 %v108, %v114
    %v131 = vmax.f32 %v129, %v130
    %v132 = vrot.slane %v131, 4
    %v133 = vmax.f32 %v131, %v132
    %v134 = vrot.slane %v133, 2
    %v135 = vmax.f32 %v133, %v134
    %v136 = vrot.slane %v135, 1
    %v137 = vmax.f32 %v135, %v136
    %vm138 = vcmp.eq.f32.partialorder %v93, %v128
    %vm139 = vcmp.eq.f32.partialorder %v96, %v128
    %vm140 = vcmp.eq.f32.partialorder %v99, %v128
    %vm141 = vcmp.eq.f32.partialorder %v102, %v128
    %vm142 = vcmp.eq.f32.partialorder %v105, %v137
    %vm143 = vcmp.eq.f32.partialorder %v108, %v137
    %vm144 = vcmp.eq.f32.partialorder %v111, %v137
    %vm145 = vcmp.eq.f32.partialorder %v114, %v137
    %v146 = vsel %vm138, %v116, 32
    %v147 = vsel %vm139, %v117, 32
    %v148 = vsel %vm140, %v118, 32
    %v149 = vsel %vm141, %v119, 32
    %v150 = vsel %vm142, %v116, 32
    %v151 = vsel %vm143, %v117, 32
    %v152 = vsel %vm144, %v118, 32
    %v153 = vsel %vm145, %v119, 32
    %vm154 = vcmp.lt.s32.totalorder %v146, %v148
    %v155 = vsel %vm154, %v146, %v148
    %vm156 = vcmp.lt.s32.totalorder %v147, %v149
    %v157 = vsel %vm156, %v147, %v149
    %vm158 = vcmp.lt.s32.totalorder %v155, %v157
    %v159 = vsel %vm158, %v155, %v157
    %v160 = vrot.slane %v159, 4
    %vm161 = vcmp.lt.s32.totalorder %v159, %v160
    %v162 = vsel %vm161, %v159, %v160
    %v163 = vrot.slane %v162, 2
    %vm164 = vcmp.lt.s32.totalorder %v162, %v163
    %v165 = vsel %vm164, %v162, %v163
    %v166 = vrot.slane %v165, 1
    %vm167 = vcmp.lt.s32.totalorder %v165, %v166
    %v168 = vsel %vm167, %v165, %v166
    %vm169 = vcmp.lt.s32.totalorder %v150, %v152
    %v170 = vsel %vm169, %v150, %v152
    %vm171 = vcmp.lt.s32.totalorder %v151, %v153
    %v172 = vsel %vm171, %v151, %v153
    %vm173 = vcmp.lt.s32.totalorder %v170, %v172
    %v174 = vsel %vm173, %v170, %v172
    %v175 = vrot.slane %v174, 4
    %vm176 = vcmp.lt.s32.totalorder %v174, %v175
    %v177 = vsel %vm176, %v174, %v175
    %v178 = vrot.slane %v177, 2
    %vm179 = vcmp.lt.s32.totalorder %v177, %v178
    %v180 = vsel %vm179, %v177, %v178
    %v181 = vrot.slane %v180, 1
    %vm182 = vcmp.lt.s32.totalorder %v180, %v181
    %v183 = vsel %vm182, %v180, %v181
    %vm184 = vcmp.lt.s32.totalorder %v168, 31
    %v185 = vsel %vm184, %v168, 31
    %vm186 = vcmp.lt.s32.totalorder %v183, 31
    %v187 = vsel %vm186, %v183, 31
    %vm188 = vcmp.eq.s32.totalorder %v116, %v185
    %vm189 = vcmp.eq.s32.totalorder %v117, %v185
    %vm190 = vcmp.eq.s32.totalorder %v118, %v185
    %vm191 = vcmp.eq.s32.totalorder %v119, %v185
    %vm192 = vcmp.eq.s32.totalorder %v116, %v187
    %vm193 = vcmp.eq.s32.totalorder %v117, %v187
    %vm194 = vcmp.eq.s32.totalorder %v118, %v187
    %vm195 = vcmp.eq.s32.totalorder %v119, %v187
    %v196 = vsel %vm188, 1, 0
    %v197 = vsel %vm189, 1, 0
    %v198 = vsel %vm190, 1, 0
    %v199 = vsel %vm191, 1, 0
    %v200 = vsel %vm192, 1, 0
    %v201 = vsel %vm193, 1, 0
    %v202 = vsel %vm194, 1, 0
    %v203 = vsel %vm195, 1, 0
    %v204 = vcvt.s32.f32 %v196
    %v205 = vcvt.s32.f32 %v197
    %v206 = vcvt.s32.f32 %v198
    %v207 = vcvt.s32.f32 %v199
    %v208 = vcvt.s32.f32 %v200
    %v209 = vcvt.s32.f32 %v201
    %v210 = vcvt.s32.f32 %v202
    %v211 = vcvt.s32.f32 %v203
    %v212 = vmul.f32 %v204, %v56
    %v213 = vmul.f32 %v205, %v57
    %v214 = vmul.f32 %v206, %v58
    %v215 = vmul.f32 %v207, %v59
    %v216 = vmul.f32 %v208, %v60
    %v217 = vmul.f32 %v209, %v61
    %v218 = vmul.f32 %v210, %v62
    %v219 = vmul.f32 %v211, %v63
    %v220 = vsel %vm90, %v212, 0.0
    %v221 = vsel %vm90, %v213, 0.0
    %v222 = vadd.f32 %v220, %v221
    %v223 = vsel %vm90, %v214, 0.0
    %v224 = vadd.f32 %v222, %v223
    %v225 = vsel %vm90, %v215, 0.0
    %v226 = vadd.f32 %v224, %v225
    %v227 = vrot.slane %v226, 4
    %v228 = vadd.f32 %v226, %v227
    %v229 = vrot.slane %v228, 2
    %v230 = vadd.f32 %v228, %v229
    %v231 = vrot.slane %v230, 1
    %v232 = vadd.f32 %v230, %v231
    %v233 = vsel %vm90, %v216, 0.0
    %v234 = vsel %vm90, %v217, 0.0
    %v235 = vadd.f32 %v233, %v234
    %v236 = vsel %vm90, %v218, 0.0
    %v237 = vadd.f32 %v235, %v236
    %v238 = vsel %vm90, %v219, 0.0
    %v239 = vadd.f32 %v237, %v238
    %v240 = vrot.slane %v239, 4
    %v241 = vadd.f32 %v239, %v240
    %v242 = vrot.slane %v241, 2
    %v243 = vadd.f32 %v241, %v242
    %v244 = vrot.slane %v243, 1
    %v245 = vadd.f32 %v243, %v244
    %vm248 = vcmask 1041409
    %v249 = vsel %vm248, %v245, %v232
    %vm251 = vcmask 254976
    %252 = vst.msk [vmem:[#allocation7] sm:$0x3] %vm251, %v249
    %v253 = vsel %vm248, %v187, %v185
    %vm254 = vcmask 1024
    %255 = vst.msk [vmem:[%s5] sm:$0x3] %vm254, %v253
    // Predicated region
    $region26: #{_lambda_.1} parent=1 // pred_check
      _
    $region27: #{_lambda_.1} parent=1 // pred_check_branch
      %257 = sbr.rel (0) target = $region29
    $region28: #{_lambda_.1} parent=1 // pred_region
      %s259 = ssub.s32 32, 32
      %260 = vsyncadd [#allocation4], %s259
      %s262 = sshll.u32 [#allocation7], 4
      %s263 = int_to_ptr.vmem [resolvable:$true] %s262
      %265 = dma.vmem_to_hbm [thread:$0]  %s263, 32, %s4, [#allocation4]
    $region29: #{_lambda_.1} parent=1 // pred_fallthru
      _
    // Predicated region
    $region30: #{_lambda_.1} parent=1 // pred_check
      _
    $region31: #{_lambda_.1} parent=1 // pred_check_branch
      %267 = sbr.rel (0) target = $region33
    $region32: #{_lambda_.1} parent=1 // pred_region
      _
    $region33: #{_lambda_.1} parent=1 // pred_fallthru
      _
    // Predicated region
    $region34: #{_lambda_.1} parent=1 // pred_check
      _
    $region35: #{_lambda_.1} parent=1 // pred_check_branch
      %269 = sbr.rel (0) target = $region37
    $region36: #{_lambda_.1} parent=1 // pred_region
      %270 = dma.done [#allocation4], 32
    $region37: #{_lambda_.1} parent=1 // pred_fallthru
      _
    // Predicated region
    $region38: #{_lambda_.1} parent=1 // pred_check
      _
    $region39: #{_lambda_.1} parent=1 // pred_check_branch
      %272 = sbr.rel (0) target = $region41
    $region40: #{_lambda_.1} parent=1 // pred_region
      _
    $region41: #{_lambda_.1} parent=1 // pred_fallthru
      _
    %273 = vsyncpa [#allocation3], 1
    %274 = vsyncpa [#allocation6], 1
    %275 = vsyncpa [#allocation4], 1

</llo_original>
